<compile_context>
chip_gen: v6e
topology: v6e:2x2x1
jax: 0.10.0
libtpu: 0.0.40
codegen_flags: <defaults>
</compile_context>

<pallas_src>
import math

import jax
import jax.numpy as jnp
from jax.experimental import pallas as pl
from jax.experimental.pallas import tpu as pltpu

_SUBLANE = 8  # sublane width of a vreg (second-to-last dim)


def _round_up(n, m):
    return ((n + m - 1) // m) * m


def _fused_mlp_kernel(x_ref, *rest):
    """rest = (w0, b0, w1, b1, ..., w{L-1}, b{L-1}, o_ref).

    x_ref: (TB, F0)   w_l: (F_l, F_{l+1})   b_l: (1, F_{l+1})   o_ref: (TB, FL)
    The activation stays in vregs/VMEM across the whole layer stack (the
    Python loop is unrolled at trace time).  Dropout is identity in eval mode.
    """
    o_ref = rest[-1]
    wb_refs = rest[:-1]
    num_layers = len(wb_refs) // 2

    h = x_ref[...]
    for l in range(num_layers):
        w = wb_refs[2 * l][...]
        b = wb_refs[2 * l + 1][...]          # (1, Out) broadcasts over rows
        h = jnp.dot(h, w, preferred_element_type=jnp.float32) + b
    o_ref[...] = h.astype(o_ref.dtype)


def linear_fc_forward(x, params, *, batch_tile=1024):
    """Fused forward for the whole LinearFC stack (dropout = identity in eval).

    batch_tile: rows per grid step.  1024 amortizes the ~0.35 us per-step
    overhead while keeping the grid >= 2 steps (v7x 2-TC sharding) once the
    batch exceeds one tile.  VMEM per step is tiny (unpadded ~200 B/row), so
    this fits comfortably within the explicit 32 MiB limit on all generations.
    """
    batch, feat = x.shape
    assert feat == params[0][0].shape[0]
    dims = [feat] + [w.shape[1] for w, _ in params]

    # Minimal-waste batch tiling: cover the batch in cdiv(batch, batch_tile)
    # steps with the smallest sublane-aligned tile (no rounding up to a
    # multiple of batch_tile).
    n_tiles = max(1, pl.cdiv(batch, batch_tile))
    tb = _round_up(pl.cdiv(batch, n_tiles), _SUBLANE)
    b_pad = n_tiles * tb

    x_in = x
    if b_pad != batch:
        x_in = jnp.zeros((b_pad, feat), x.dtype).at[:batch].set(x)

    fused_inputs = [x_in]
    # Full last dim (feat) => exempt from 128-lane divisibility; tb is a
    # multiple of 8.
    in_specs = [pl.BlockSpec((tb, feat), lambda i: (i, 0))]
    for w, b in params:
        fused_inputs += [w, b]
        # Full-array blocks, same block index every grid step: weights and
        # biases stay VMEM-resident and are DMA'd once, unpadded.
        in_specs += [
            pl.BlockSpec(w.shape, lambda i: (0, 0)),
            pl.BlockSpec(b.shape, lambda i: (0, 0)),
        ]

    out = pl.pallas_call(
        _fused_mlp_kernel,
        out_shape=jax.ShapeDtypeStruct((b_pad, dims[-1]), x.dtype),
        grid=(n_tiles,),
        in_specs=in_specs,
        out_specs=pl.BlockSpec((tb, dims[-1]), lambda i: (i, 0)),
        compiler_params=pltpu.CompilerParams(
            dimension_semantics=("parallel",),
            vmem_limit_bytes=32 * 1024 * 1024,  # explicit; portable v5e/v6e/v7x
        ),
    )(*fused_inputs)

    return out[:batch] if b_pad != batch else out


def init_linear_params(key, in_features, out_features):
    """Deterministic init matching torch.nn.Linear defaults (uniform +-1/sqrt(in)).

    Weight stored pre-transposed as (in, out); bias stored as (1, out) so the
    forward pass needs zero per-call parameter transforms.
    """
    k_w, k_b = jax.random.split(key)
    bound = 1.0 / math.sqrt(in_features)
    w = jax.random.uniform(
        k_w, (in_features, out_features), jnp.float32, minval=-bound, maxval=bound
    )
    b = jax.random.uniform(
        k_b, (1, out_features), jnp.float32, minval=-bound, maxval=bound
    )
    return w, b


def build_linear_fc_params(key, num_layers, num_features, num_classes,
                           num_hidden_nodes):
    params = []
    keys = jax.random.split(key, num_layers)
    params.append(init_linear_params(keys[0], num_features, num_hidden_nodes))
    for l in range(1, num_layers - 1):
        params.append(
            init_linear_params(keys[l], num_hidden_nodes, num_hidden_nodes)
        )
    params.append(
        init_linear_params(keys[num_layers - 1], num_hidden_nodes, num_classes)
    )
    return params


if __name__ == "__main__":
    # Small shapes consistent with the module's constructor.
    num_layers = 3
    num_features = 32
    num_hidden_nodes = 64
    num_classes = 16
    batch = 8

    key = jax.random.PRNGKey(0)
    k_params, k_x = jax.random.split(key)

    params = build_linear_fc_params(
        k_params, num_layers, num_features, num_classes, num_hidden_nodes
    )
    x = jax.random.normal(k_x, (batch, num_features), jnp.float32)

    out = linear_fc_forward(x, params)
    jax.block_until_ready(out)

    # Sanity: pure-JAX reference (dropout is identity in eval mode).
    ref = x
    for w, b in params:
        ref = ref @ w + b
    assert out.shape == (batch, num_classes)
    assert jnp.allclose(out, ref, atol=1e-5, rtol=1e-5)

    print("KERNEL_OK")
</pallas_src>

<mosaic_0001>
module attributes {stable_mosaic.version = 11 : i64} {
  func.func @_fused_mlp_kernel(%arg0: i32, %arg1: memref<8x32xf32, #tpu.memory_space<vmem>>, %arg2: memref<32x64xf32, #tpu.memory_space<vmem>>, %arg3: memref<1x64xf32, #tpu.memory_space<vmem>>, %arg4: memref<64x64xf32, #tpu.memory_space<vmem>>, %arg5: memref<1x64xf32, #tpu.memory_space<vmem>>, %arg6: memref<64x16xf32, #tpu.memory_space<vmem>>, %arg7: memref<1x16xf32, #tpu.memory_space<vmem>>, %arg8: memref<8x16xf32, #tpu.memory_space<vmem>>) attributes {dimension_semantics = [#tpu.dimension_semantics<parallel>], iteration_bounds = array<i64: 1>, scalar_prefetch = 0 : i64, scratch_operands = 0 : i64, tpu.core_type = #tpu.core_type<tc>, window_params = [{transform_indices = @transform_0, window_bounds = array<i64: 8, 32>}, {pipeline_mode = #tpu.pipeline_mode<synchronous>, transform_indices = @transform_1, window_bounds = array<i64: 32, 64>}, {pipeline_mode = #tpu.pipeline_mode<synchronous>, transform_indices = @transform_2, window_bounds = array<i64: 1, 64>}, {pipeline_mode = #tpu.pipeline_mode<synchronous>, transform_indices = @transform_3, window_bounds = array<i64: 64, 64>}, {pipeline_mode = #tpu.pipeline_mode<synchronous>, transform_indices = @transform_4, window_bounds = array<i64: 1, 64>}, {pipeline_mode = #tpu.pipeline_mode<synchronous>, transform_indices = @transform_5, window_bounds = array<i64: 64, 16>}, {pipeline_mode = #tpu.pipeline_mode<synchronous>, transform_indices = @transform_6, window_bounds = array<i64: 1, 16>}, {transform_indices = @transform_7, window_bounds = array<i64: 8, 16>}]} {
    %c0 = arith.constant 0 : index
    %c0_0 = arith.constant 0 : index
    %0 = vector.load %arg1[%c0, %c0_0] : memref<8x32xf32, #tpu.memory_space<vmem>>, vector<8x32xf32>
    %c0_1 = arith.constant 0 : index
    %c0_2 = arith.constant 0 : index
    %1 = vector.load %arg2[%c0_1, %c0_2] : memref<32x64xf32, #tpu.memory_space<vmem>>, vector<32x64xf32>
    %c0_3 = arith.constant 0 : index
    %c0_4 = arith.constant 0 : index
    %2 = vector.load %arg3[%c0_3, %c0_4] : memref<1x64xf32, #tpu.memory_space<vmem>>, vector<1x64xf32>
    %cst = arith.constant dense<0.000000e+00> : vector<8x64xf32>
    %3 = tpu.matmul %0, %1, %cst {dimension_numbers = #tpu.dot_dimension_numbers<[1], [0], [0], [1], [0, 0, 1, 1], [], []>} : vector<8x32xf32>, vector<32x64xf32>, vector<8x64xf32> -> vector<8x64xf32>
    %4 = vector.broadcast %2 : vector<1x64xf32> to vector<8x64xf32>
    %5 = arith.addf %3, %4 : vector<8x64xf32>
    %c0_5 = arith.constant 0 : index
    %c0_6 = arith.constant 0 : index
    %6 = vector.load %arg4[%c0_5, %c0_6] : memref<64x64xf32, #tpu.memory_space<vmem>>, vector<64x64xf32>
    %c0_7 = arith.constant 0 : index
    %c0_8 = arith.constant 0 : index
    %7 = vector.load %arg5[%c0_7, %c0_8] : memref<1x64xf32, #tpu.memory_space<vmem>>, vector<1x64xf32>
    %cst_9 = arith.constant dense<0.000000e+00> : vector<8x64xf32>
    %8 = tpu.matmul %5, %6, %cst_9 {dimension_numbers = #tpu.dot_dimension_numbers<[1], [0], [0], [1], [0, 0, 1, 1], [], []>} : vector<8x64xf32>, vector<64x64xf32>, vector<8x64xf32> -> vector<8x64xf32>
    %9 = vector.broadcast %7 : vector<1x64xf32> to vector<8x64xf32>
    %10 = arith.addf %8, %9 : vector<8x64xf32>
    %c0_10 = arith.constant 0 : index
    %c0_11 = arith.constant 0 : index
    %11 = vector.load %arg6[%c0_10, %c0_11] : memref<64x16xf32, #tpu.memory_space<vmem>>, vector<64x16xf32>
    %c0_12 = arith.constant 0 : index
    %c0_13 = arith.constant 0 : index
    %12 = vector.load %arg7[%c0_12, %c0_13] : memref<1x16xf32, #tpu.memory_space<vmem>>, vector<1x16xf32>
    %cst_14 = arith.constant dense<0.000000e+00> : vector<8x16xf32>
    %13 = tpu.matmul %10, %11, %cst_14 {dimension_numbers = #tpu.dot_dimension_numbers<[1], [0], [0], [1], [0, 0, 1, 1], [], []>} : vector<8x64xf32>, vector<64x16xf32>, vector<8x16xf32> -> vector<8x16xf32>
    %14 = vector.broadcast %12 : vector<1x16xf32> to vector<8x16xf32>
    %15 = arith.addf %13, %14 : vector<8x16xf32>
    %c0_15 = arith.constant 0 : index
    %c0_16 = arith.constant 0 : index
    %16 = vector.load %arg8[%c0_15, %c0_16] : memref<8x16xf32, #tpu.memory_space<vmem>>, vector<8x16xf32>
    tpu.vector_store %arg8[%c0_15, %c0_16], %15 {strides = array<i32>} : memref<8x16xf32, #tpu.memory_space<vmem>>, vector<8x16xf32>,
    return
  }
  func.func @transform_0(%arg0: i32) -> (i32, i32) {
    %c0_i32 = arith.constant 0 : i32
    %c0_i32_0 = arith.constant 0 : i32
    return %arg0, %c0_i32 : i32, i32
  }
  func.func @transform_1(%arg0: i32) -> (i32, i32) {
    %c0_i32 = arith.constant 0 : i32
    %c0_i32_0 = arith.constant 0 : i32
    %c0_i32_1 = arith.constant 0 : i32
    return %c0_i32, %c0_i32_0 : i32, i32
  }
  func.func @transform_2(%arg0: i32) -> (i32, i32) {
    %c0_i32 = arith.constant 0 : i32
    %c0_i32_0 = arith.constant 0 : i32
    %c0_i32_1 = arith.constant 0 : i32
    return %c0_i32, %c0_i32_0 : i32, i32
  }
  func.func @transform_3(%arg0: i32) -> (i32, i32) {
    %c0_i32 = arith.constant 0 : i32
    %c0_i32_0 = arith.constant 0 : i32
    %c0_i32_1 = arith.constant 0 : i32
    return %c0_i32, %c0_i32_0 : i32, i32
  }
  func.func @transform_4(%arg0: i32) -> (i32, i32) {
    %c0_i32 = arith.constant 0 : i32
    %c0_i32_0 = arith.constant 0 : i32
    %c0_i32_1 = arith.constant 0 : i32
    return %c0_i32, %c0_i32_0 : i32, i32
  }
  func.func @transform_5(%arg0: i32) -> (i32, i32) {
    %c0_i32 = arith.constant 0 : i32
    %c0_i32_0 = arith.constant 0 : i32
    %c0_i32_1 = arith.constant 0 : i32
    return %c0_i32, %c0_i32_0 : i32, i32
  }
  func.func @transform_6(%arg0: i32) -> (i32, i32) {
    %c0_i32 = arith.constant 0 : i32
    %c0_i32_0 = arith.constant 0 : i32
    %c0_i32_1 = arith.constant 0 : i32
    return %c0_i32, %c0_i32_0 : i32, i32
  }
  func.func @transform_7(%arg0: i32) -> (i32, i32) {
    %c0_i32 = arith.constant 0 : i32
    %c0_i32_0 = arith.constant 0 : i32
    return %arg0, %c0_i32 : i32, i32
  }
}

</mosaic_0001>

<llo_original>
// kernel: tpu_custom_call.1
$region0: #{tpu_custom_call.1}
  #allocation0 [shape = 'u32[]', space=smem, size = 0x4, offset = 0x4, fixed_abs, tag = 'smem constant byte address 0x4 - core index']
  #allocation1 [shape = 'u32[144,128]{1,0:T(1,128)}', space=vmem, size = 0x12000, scoped, tag = 'internal scratch']
  %s0 = inlined_call_operand.vmem [shape: f32[8,32], index: 0, kind: input, shape index: {}]
  %s1 = inlined_call_operand.hbm [shape: f32[32,64], index: 1, kind: input, shape index: {}]
  %s2 = inlined_call_operand.vmem [shape: f32[1,64], index: 2, kind: input, shape index: {}]
  %s3 = inlined_call_operand.vmem [shape: f32[64,64], index: 3, kind: input, shape index: {}]
  %s4 = inlined_call_operand.vmem [shape: f32[1,64], index: 4, kind: input, shape index: {}]
  %s5 = inlined_call_operand.vmem [shape: f32[64,16], index: 5, kind: input, shape index: {}]
  %s6 = inlined_call_operand.vmem [shape: f32[1,16], index: 6, kind: input, shape index: {}]
  %s7 = inlined_call_operand.hbm [shape: f32[8,16], index: 7, kind: output, shape index: {}]
  %s8 = sld [smem:[#allocation0]]
  $region42: #{tpu_custom_call.1} parent=0
    _
  %s10 = ssub.s32 1, %s8
  %s11 = scalar_select 0, %s10, %s8
  $region1: #{tpu_custom_call.1} parent=0
    #allocation2 [shape = 'u8[16384]{0}', space=vmem, size = 0x4000, scoped, tag = 'input window, operand 1, single buffered']
    #allocation3 [shape = 's32[1]{0}', space=sflag, size = 0x4, scoped, tag = 'scoped memory for tpu_custom_call.1']
    #allocation4 [shape = 's32[1]{0}', space=sflag, size = 0x4, scoped, tag = 'scoped memory for tpu_custom_call.1']
    #allocation5 [shape = 'u8[4096]{0}', space=vmem, size = 0x1000, scoped, tag = 'output window, operand 0, single buffered']
    %12 = vsyncpa [#allocation3], 0
    %13 = vsyncpa [#allocation4], 0
    // Predicated region
    $region2: #{tpu_custom_call.1} parent=1 // pred_check
      _
    $region3: #{tpu_custom_call.1} parent=1 // pred_check_branch
      %15 = sbr.rel (0) target = $region5
    $region4: #{tpu_custom_call.1} parent=1 // pred_region
      _
    $region5: #{tpu_custom_call.1} parent=1 // pred_fallthru
      _
    // Predicated region
    $region6: #{tpu_custom_call.1} parent=1 // pred_check
      _
    $region7: #{tpu_custom_call.1} parent=1 // pred_check_branch
      %17 = sbr.rel (0) target = $region9
    $region8: #{tpu_custom_call.1} parent=1 // pred_region
      %s19 = ssub.s32 512, 512
      %20 = vsyncadd [#allocation3], %s19
      %s21 = sshll.u32 [#allocation2], 4
      %s22 = int_to_ptr.vmem [resolvable:$true] %s21
      %27 = dma.hbm_to_vmem [thread:$0]  %s1, 512, %s22, [#allocation3], 128, 128, 8
    $region9: #{tpu_custom_call.1} parent=1 // pred_fallthru
      _
    // Predicated region
    $region10: #{tpu_custom_call.1} parent=1 // pred_check
      _
    $region11: #{tpu_custom_call.1} parent=1 // pred_check_branch
      %29 = sbr.rel (0) target = $region13
    $region12: #{tpu_custom_call.1} parent=1 // pred_region
      _
    $region13: #{tpu_custom_call.1} parent=1 // pred_fallthru
      _
    // Predicated region
    $region14: #{tpu_custom_call.1} parent=1 // pred_check
      _
    $region15: #{tpu_custom_call.1} parent=1 // pred_check_branch
      %31 = sbr.rel (0) target = $region17
    $region16: #{tpu_custom_call.1} parent=1 // pred_region
      _
    $region17: #{tpu_custom_call.1} parent=1 // pred_fallthru
      _
    // Predicated region
    $region18: #{tpu_custom_call.1} parent=1 // pred_check
      _
    $region19: #{tpu_custom_call.1} parent=1 // pred_check_branch
      %33 = sbr.rel (0) target = $region21
    $region20: #{tpu_custom_call.1} parent=1 // pred_region
      _
    $region21: #{tpu_custom_call.1} parent=1 // pred_fallthru
      _
    // Predicated region
    $region22: #{tpu_custom_call.1} parent=1 // pred_check
      _
    $region23: #{tpu_custom_call.1} parent=1 // pred_check_branch
      %35 = sbr.rel (0) target = $region25
    $region24: #{tpu_custom_call.1} parent=1 // pred_region
      _
    $region25: #{tpu_custom_call.1} parent=1 // pred_fallthru
      _
    // Predicated region
    $region26: #{tpu_custom_call.1} parent=1 // pred_check
      _
    $region27: #{tpu_custom_call.1} parent=1 // pred_check_branch
      %37 = sbr.rel (0) target = $region29
    $region28: #{tpu_custom_call.1} parent=1 // pred_region
      _
    $region29: #{tpu_custom_call.1} parent=1 // pred_fallthru
      _
    // Predicated region
    $region30: #{tpu_custom_call.1} parent=1 // pred_check
      _
    $region31: #{tpu_custom_call.1} parent=1 // pred_check_branch
      %39 = sbr.rel (0) target = $region33
    $region32: #{tpu_custom_call.1} parent=1 // pred_region
      %40 = dma.done [#allocation3], 512
    $region33: #{tpu_custom_call.1} parent=1 // pred_fallthru
      _
    %v41 = vld [vmem:[%s0] sm:$0xff]
    %v42 = vld [vmem:[#allocation2] sm:$0xff]
    %v43 = vld [vmem:[#allocation2 + $0x8] sm:$0xff]
    %v44 = vld [vmem:[#allocation2 + $0x10] sm:$0xff]
    %v45 = vld [vmem:[#allocation2 + $0x18] sm:$0xff]
    %v46 = vld [vmem:[%s2] sm:$0x1]
    %v48 = vlaneseq
    %v49 = vshrl.u32 %v48, 7
    %v50 = vsub.s32 0, %v49
    %v51 = vrot.slane %v46, %v50
    %vm53 = vcmask 261120
    %v55 = vsel %vm53, %v41, 0
    %57 = vmatprep.subr.mxu0 0.0
    %58 = vmatpush1.msra.mxu0 0.0
    %59 = vmatprep.subr.mxu0 0.0
    %60 = vmatpush1.msra.mxu0 0.0
    %61 = vmatprep.subr.mxu0 0.0
    %62 = vmatpush1.msra.mxu0 0.0
    %63 = vmatprep.subr.mxu0 0.0
    %64 = vmatpush1.msra.mxu0 0.0
    %65 = vmatprep.subr.mxu0 0.0
    %66 = vmatpush1.msra.mxu0 0.0
    %67 = vmatprep.subr.mxu0 0.0
    %68 = vmatpush1.msra.mxu0 0.0
    %69 = vmatprep.subr.mxu0 0.0
    %70 = vmatpush1.msra.mxu0 0.0
    %71 = vmatprep.subr.mxu0 0.0
    %72 = vmatpush1.msra.mxu0 0.0
    %73 = vmatprep.subr.mxu0 0.0
    %74 = vmatpush1.msra.mxu0 0.0
    %75 = vmatprep.subr.mxu0 0.0
    %76 = vmatpush1.msra.mxu0 0.0
    %77 = vmatprep.subr.mxu0 0.0
    %78 = vmatpush1.msra.mxu0 0.0
    %79 = vmatprep.subr.mxu0 0.0
    %80 = vmatpush1.msra.mxu0 0.0
    %81 = vmatprep.subr.mxu0 0.0
    %82 = vmatpush1.msra.mxu0 %v45
    %83 = vmatprep.subr.mxu0 0.0
    %84 = vmatpush1.msra.mxu0 %v44
    %85 = vmatprep.subr.mxu0 0.0
    %86 = vmatpush1.msra.mxu0 %v43
    %87 = vmatprep.subr.mxu0 0.0
    %88 = vmatpush1.msra.mxu0 %v42
    %89 = vmatprep.subr.mxu0 0.0
    %90 = vmatpush2.msra.mxu0 0.0
    %91 = vmatprep.subr.mxu0 0.0
    %92 = vmatpush2.msra.mxu0 0.0
    %93 = vmatprep.subr.mxu0 0.0
    %94 = vmatpush2.msra.mxu0 0.0
    %95 = vmatprep.subr.mxu0 0.0
    %96 = vmatpush2.msra.mxu0 0.0
    %97 = vmatprep.subr.mxu0 0.0
    %98 = vmatpush2.msra.mxu0 0.0
    %99 = vmatprep.subr.mxu0 0.0
    %100 = vmatpush2.msra.mxu0 0.0
    %101 = vmatprep.subr.mxu0 0.0
    %102 = vmatpush2.msra.mxu0 0.0
    %103 = vmatprep.subr.mxu0 0.0
    %104 = vmatpush2.msra.mxu0 0.0
    %105 = vmatprep.subr.mxu0 0.0
    %106 = vmatpush2.msra.mxu0 0.0
    %107 = vmatprep.subr.mxu0 0.0
    %108 = vmatpush2.msra.mxu0 0.0
    %109 = vmatprep.subr.mxu0 0.0
    %110 = vmatpush2.msra.mxu0 0.0
    %111 = vmatprep.subr.mxu0 0.0
    %112 = vmatpush2.msra.mxu0 0.0
    %113 = vmatprep.subr.mxu0 0.0
    %114 = vmatpush2.msra.mxu0 0.0
    %115 = vmatprep.subr.mxu0 0.0
    %116 = vmatpush2.msra.mxu0 0.0
    %117 = vmatprep.subr.mxu0 0.0
    %118 = vmatpush2.msra.mxu0 0.0
    %119 = vmatprep.subr.mxu0 0.0
    %120 = vmatpush2.msra.mxu0 0.0
    %121 = vmatprep.mubr.f32.mxu0 0.0
    %122 = vmatmul.mubr.f32.gmra.mxu0 %v55
    %v123 = vpop.f32.mrf.mxu0
    %v124 = vadd.f32 %v51, %v123
    %v125 = vpop.f32.mrf.mxu0
    %126 = vdwg.mxu0
    %v127 = vld [vmem:[%s3] sm:$0xff]
    %v128 = vld [vmem:[%s3 + $0x8] sm:$0xff]
    %v129 = vld [vmem:[%s3 + $0x10] sm:$0xff]
    %v130 = vld [vmem:[%s3 + $0x18] sm:$0xff]
    %v131 = vld [vmem:[%s3 + $0x20] sm:$0xff]
    %v132 = vld [vmem:[%s3 + $0x28] sm:$0xff]
    %v133 = vld [vmem:[%s3 + $0x30] sm:$0xff]
    %v134 = vld [vmem:[%s3 + $0x38] sm:$0xff]
    %v135 = vld [vmem:[%s4] sm:$0x1]
    %v137 = vlaneseq
    %v138 = vshrl.u32 %v137, 7
    %v139 = vsub.s32 0, %v138
    %v140 = vrot.slane %v135, %v139
    %vm142 = vcmask 523264
    %v144 = vsel %vm142, %v124, 0
    %146 = vmatprep.subr.mxu0 0.0
    %147 = vmatpush1.msra.mxu0 0.0
    %148 = vmatprep.subr.mxu0 0.0
    %149 = vmatpush1.msra.mxu0 0.0
    %150 = vmatprep.subr.mxu0 0.0
    %151 = vmatpush1.msra.mxu0 0.0
    %152 = vmatprep.subr.mxu0 0.0
    %153 = vmatpush1.msra.mxu0 0.0
    %154 = vmatprep.subr.mxu0 0.0
    %155 = vmatpush1.msra.mxu0 0.0
    %156 = vmatprep.subr.mxu0 0.0
    %157 = vmatpush1.msra.mxu0 0.0
    %158 = vmatprep.subr.mxu0 0.0
    %159 = vmatpush1.msra.mxu0 0.0
    %160 = vmatprep.subr.mxu0 0.0
    %161 = vmatpush1.msra.mxu0 0.0
    %162 = vmatprep.subr.mxu0 0.0
    %163 = vmatpush1.msra.mxu0 %v134
    %164 = vmatprep.subr.mxu0 0.0
    %165 = vmatpush1.msra.mxu0 %v133
    %166 = vmatprep.subr.mxu0 0.0
    %167 = vmatpush1.msra.mxu0 %v132
    %168 = vmatprep.subr.mxu0 0.0
    %169 = vmatpush1.msra.mxu0 %v131
    %170 = vmatprep.subr.mxu0 0.0
    %171 = vmatpush1.msra.mxu0 %v130
    %172 = vmatprep.subr.mxu0 0.0
    %173 = vmatpush1.msra.mxu0 %v129
    %174 = vmatprep.subr.mxu0 0.0
    %175 = vmatpush1.msra.mxu0 %v128
    %176 = vmatprep.subr.mxu0 0.0
    %177 = vmatpush1.msra.mxu0 %v127
    %178 = vmatprep.subr.mxu0 0.0
    %179 = vmatpush2.msra.mxu0 0.0
    %180 = vmatprep.subr.mxu0 0.0
    %181 = vmatpush2.msra.mxu0 0.0
    %182 = vmatprep.subr.mxu0 0.0
    %183 = vmatpush2.msra.mxu0 0.0
    %184 = vmatprep.subr.mxu0 0.0
    %185 = vmatpush2.msra.mxu0 0.0
    %186 = vmatprep.subr.mxu0 0.0
    %187 = vmatpush2.msra.mxu0 0.0
    %188 = vmatprep.subr.mxu0 0.0
    %189 = vmatpush2.msra.mxu0 0.0
    %190 = vmatprep.subr.mxu0 0.0
    %191 = vmatpush2.msra.mxu0 0.0
    %192 = vmatprep.subr.mxu0 0.0
    %193 = vmatpush2.msra.mxu0 0.0
    %194 = vmatprep.subr.mxu0 0.0
    %195 = vmatpush2.msra.mxu0 0.0
    %196 = vmatprep.subr.mxu0 0.0
    %197 = vmatpush2.msra.mxu0 0.0
    %198 = vmatprep.subr.mxu0 0.0
    %199 = vmatpush2.msra.mxu0 0.0
    %200 = vmatprep.subr.mxu0 0.0
    %201 = vmatpush2.msra.mxu0 0.0
    %202 = vmatprep.subr.mxu0 0.0
    %203 = vmatpush2.msra.mxu0 0.0
    %204 = vmatprep.subr.mxu0 0.0
    %205 = vmatpush2.msra.mxu0 0.0
    %206 = vmatprep.subr.mxu0 0.0
    %207 = vmatpush2.msra.mxu0 0.0
    %208 = vmatprep.subr.mxu0 0.0
    %209 = vmatpush2.msra.mxu0 0.0
    %210 = vmatprep.mubr.f32.mxu0 0.0
    %211 = vmatmul.mubr.f32.gmra.mxu0 %v144
    %v212 = vpop.f32.mrf.mxu0
    %v213 = vadd.f32 %v140, %v212
    %v214 = vpop.f32.mrf.mxu0
    %215 = vdwg.mxu0
    %v216 = vld [vmem:[%s5] sm:$0xff]
    %v217 = vld [vmem:[%s5 + $0x8] sm:$0xff]
    %v218 = vld [vmem:[%s5 + $0x10] sm:$0xff]
    %v219 = vld [vmem:[%s5 + $0x18] sm:$0xff]
    %v220 = vld [vmem:[%s5 + $0x20] sm:$0xff]
    %v221 = vld [vmem:[%s5 + $0x28] sm:$0xff]
    %v222 = vld [vmem:[%s5 + $0x30] sm:$0xff]
    %v223 = vld [vmem:[%s5 + $0x38] sm:$0xff]
    %v224 = vld [vmem:[%s6] sm:$0x1]
    %v226 = vlaneseq
    %v227 = vshrl.u32 %v226, 7
    %v228 = vsub.s32 0, %v227
    %v229 = vrot.slane %v224, %v228
    %v232 = vsel %vm142, %v213, 0
    %234 = vmatprep.subr.mxu0 0.0
    %235 = vmatpush1.msra.mxu0 0.0
    %236 = vmatprep.subr.mxu0 0.0
    %237 = vmatpush1.msra.mxu0 0.0
    %238 = vmatprep.subr.mxu0 0.0
    %239 = vmatpush1.msra.mxu0 0.0
    %240 = vmatprep.subr.mxu0 0.0
    %241 = vmatpush1.msra.mxu0 0.0
    %242 = vmatprep.subr.mxu0 0.0
    %243 = vmatpush1.msra.mxu0 0.0
    %244 = vmatprep.subr.mxu0 0.0
    %245 = vmatpush1.msra.mxu0 0.0
    %246 = vmatprep.subr.mxu0 0.0
    %247 = vmatpush1.msra.mxu0 0.0
    %248 = vmatprep.subr.mxu0 0.0
    %249 = vmatpush1.msra.mxu0 0.0
    %250 = vmatprep.subr.mxu0 0.0
    %251 = vmatpush1.msra.mxu0 %v223
    %252 = vmatprep.subr.mxu0 0.0
    %253 = vmatpush1.msra.mxu0 %v222
    %254 = vmatprep.subr.mxu0 0.0
    %255 = vmatpush1.msra.mxu0 %v221
    %256 = vmatprep.subr.mxu0 0.0
    %257 = vmatpush1.msra.mxu0 %v220
    %258 = vmatprep.subr.mxu0 0.0
    %259 = vmatpush1.msra.mxu0 %v219
    %260 = vmatprep.subr.mxu0 0.0
    %261 = vmatpush1.msra.mxu0 %v218
    %262 = vmatprep.subr.mxu0 0.0
    %263 = vmatpush1.msra.mxu0 %v217
    %264 = vmatprep.subr.mxu0 0.0
    %265 = vmatpush1.msra.mxu0 %v216
    %266 = vmatprep.subr.mxu0 0.0
    %267 = vmatpush2.msra.mxu0 0.0
    %268 = vmatprep.subr.mxu0 0.0
    %269 = vmatpush2.msra.mxu0 0.0
    %270 = vmatprep.subr.mxu0 0.0
    %271 = vmatpush2.msra.mxu0 0.0
    %272 = vmatprep.subr.mxu0 0.0
    %273 = vmatpush2.msra.mxu0 0.0
    %274 = vmatprep.subr.mxu0 0.0
    %275 = vmatpush2.msra.mxu0 0.0
    %276 = vmatprep.subr.mxu0 0.0
    %277 = vmatpush2.msra.mxu0 0.0
    %278 = vmatprep.subr.mxu0 0.0
    %279 = vmatpush2.msra.mxu0 0.0
    %280 = vmatprep.subr.mxu0 0.0
    %281 = vmatpush2.msra.mxu0 0.0
    %282 = vmatprep.subr.mxu0 0.0
    %283 = vmatpush2.msra.mxu0 0.0
    %284 = vmatprep.subr.mxu0 0.0
    %285 = vmatpush2.msra.mxu0 0.0
    %286 = vmatprep.subr.mxu0 0.0
    %287 = vmatpush2.msra.mxu0 0.0
    %288 = vmatprep.subr.mxu0 0.0
    %289 = vmatpush2.msra.mxu0 0.0
    %290 = vmatprep.subr.mxu0 0.0
    %291 = vmatpush2.msra.mxu0 0.0
    %292 = vmatprep.subr.mxu0 0.0
    %293 = vmatpush2.msra.mxu0 0.0
    %294 = vmatprep.subr.mxu0 0.0
    %295 = vmatpush2.msra.mxu0 0.0
    %296 = vmatprep.subr.mxu0 0.0
    %297 = vmatpush2.msra.mxu0 0.0
    %298 = vmatprep.mubr.f32.mxu0 0.0
    %299 = vmatmul.mubr.f32.gmra.mxu0 %v232
    %v300 = vpop.f32.mrf.mxu0
    %v301 = vadd.f32 %v229, %v300
    %v302 = vpop.f32.mrf.mxu0
    %303 = vdwg.mxu0
    %vm304 = vcmask 130048
    %305 = vst.msk [vmem:[#allocation5] sm:$0xff] %vm304, %v301
    // Predicated region
    $region34: #{tpu_custom_call.1} parent=1 // pred_check
      _
    $region35: #{tpu_custom_call.1} parent=1 // pred_check_branch
      %307 = sbr.rel (0) target = $region37
    $region36: #{tpu_custom_call.1} parent=1 // pred_region
      %s309 = ssub.s32 128, 128
      %310 = vsyncadd [#allocation4], %s309
      %s312 = sshll.u32 [#allocation5], 4
      %s313 = int_to_ptr.vmem [resolvable:$true] %s312
      %315 = dma.vmem_to_hbm [thread:$0]  %s313, 128, %s7, [#allocation4]
    $region37: #{tpu_custom_call.1} parent=1 // pred_fallthru
      _
    // Predicated region
    $region38: #{tpu_custom_call.1} parent=1 // pred_check
      _
    $region39: #{tpu_custom_call.1} parent=1 // pred_check_branch
      %317 = sbr.rel (0) target = $region41
    $region40: #{tpu_custom_call.1} parent=1 // pred_region
      %318 = dma.done [#allocation4], 128
    $region41: #{tpu_custom_call.1} parent=1 // pred_fallthru
      _
    %319 = vsyncpa [#allocation3], 1
    %320 = vsyncpa [#allocation4], 1

</llo_original>
